<compile_context>
chip_gen: v6e
topology: v6e:2x2x1
jax: 0.10.0
libtpu: 0.0.40
codegen_flags: <defaults>
</compile_context>

<pallas_src>
import functools
from typing import NamedTuple, Tuple

import jax
import jax.numpy as jnp
from jax.experimental import pallas as pl
from jax.experimental.pallas import tpu as pltpu

_LANE = 128      # lane width: feature dims padded to a multiple of this
_SUBLANE = 8     # sublane width: batch padded to a multiple of this


def _round_up(n, m):
    return ((n + m - 1) // m) * m


def _tpu_generation():
    """Best-effort TPU generation detection (drives tiling / VMEM budgets)."""
    try:
        kind = jax.devices()[0].device_kind.lower()
    except Exception:  # pragma: no cover - defensive
        kind = ""
    if "v7" in kind:
        return "v7x"
    if "v5" in kind and ("lite" in kind or "5e" in kind):
        return "v5e"
    if "v6" in kind or "trillium" in kind:
        return "v6e"
    return "v6e"  # safe default: 1 TC, large tiles


class MLPMeta(NamedTuple):
    """Static (hashable) metadata produced by pack_mlp_params."""
    in_dim: int
    out_dim: int
    in_pad: int
    out_pads: Tuple[int, ...]   # per-linear-layer padded output width
    relu_bf16: bool
    gen: str


# ----------------------------------------------------------------------------
# One-time parameter packing (hoisted OUT of the per-call hot path)
# ----------------------------------------------------------------------------
def pack_mlp_params(params, gen=None):
    """Transpose to [In, Out], zero-pad to lane width, cast weights to bf16,
    and pack all biases into one [L, max_out_pad] f32 array.

    Call once; reuse the result for every forward call (device arrays are
    cached, so no per-call HBM relayout work).
    """
    gen = gen or _tpu_generation()
    layers = [params["inp"]] + list(params["hidden"]) + [params["output"]]
    in_dim = int(layers[0][0].shape[1])
    out_dim = int(layers[-1][0].shape[0])

    in_pad = _round_up(in_dim, _LANE)
    out_pads = tuple(_round_up(int(w.shape[0]), _LANE) for (w, _) in layers)
    max_out_pad = max(out_pads)

    weights = []
    biases = jnp.zeros((len(layers), max_out_pad), jnp.float32)
    cur_pad = in_pad
    for li, (w, b) in enumerate(layers):
        o_dim, i_dim = int(w.shape[0]), int(w.shape[1])
        o_pad = out_pads[li]
        w_t = jnp.zeros((cur_pad, o_pad), jnp.float32).at[:i_dim, :o_dim].set(w.T)
        weights.append(w_t.astype(jnp.bfloat16))
        biases = biases.at[li, :o_dim].set(b.reshape(-1))
        cur_pad = o_pad

    packed = {"w": tuple(weights), "b": biases}
    meta = MLPMeta(in_dim=in_dim, out_dim=out_dim, in_pad=in_pad,
                   out_pads=out_pads, relu_bf16=(gen != "v5e"), gen=gen)
    return packed, meta


# ----------------------------------------------------------------------------
# Fused kernel: whole MLP in one pallas_call, activations never leave VMEM
# ----------------------------------------------------------------------------
def _fused_mlp_kernel(x_ref, *refs, out_pads, relu_bf16):
    """refs = (w_0, ..., w_{L-1}, biases, o_ref)

    w_i    : [In_pad_i, Out_pad_i] bf16 (pre-transposed: act(x @ w) == x @ W^T)
    biases : [L, max_out_pad] f32 (row li sliced statically per layer)
    Matmuls accumulate in f32 on the MXU; bias add / sigmoid in f32.
    """
    num_linear = len(out_pads)
    w_refs = refs[:num_linear]
    b_ref = refs[num_linear]
    o_ref = refs[num_linear + 1]

    h = x_ref[...]                                           # [TB, In_pad] bf16
    for li in range(num_linear):
        o_pad = out_pads[li]
        w = w_refs[li][...]                                  # [In_pad, Out_pad] bf16
        b = b_ref[li:li + 1, :o_pad]                         # [1, Out_pad] f32 (static slice)
        y = jnp.dot(h, w, preferred_element_type=jnp.float32) + b
        if li < num_linear - 1:
            if relu_bf16:
                # bf16 VALU path (v6e/v7x): halves VALU work & vreg pressure.
                h = jnp.maximum(y.astype(jnp.bfloat16), 0.0)
            else:
                # v5e: no bf16 VALU; ReLU in f32, re-quantize for the MXU.
                h = jnp.maximum(y, 0.0).astype(jnp.bfloat16)
        else:
            o_ref[...] = jax.nn.sigmoid(y).astype(o_ref.dtype)


# ----------------------------------------------------------------------------
# Tiling / VMEM budgeting
# ----------------------------------------------------------------------------
def _choose_batch_tiling(batch, gen):
    """Pick the batch tile first, then pad the batch to a multiple of it."""
    num_cores = 2 if gen == "v7x" else 1
    cap = 256 if gen == "v7x" else 512          # v7x: smaller tiles, 2-TC sharding
    b_min = _round_up(batch, _SUBLANE)
    n_tiles = max(pl.cdiv(b_min, cap),
                  2 if (num_cores > 1 and b_min >= 2 * _SUBLANE) else 1)
    tb = _round_up(pl.cdiv(b_min, n_tiles), _SUBLANE)
    b_pad = _round_up(batch, tb)
    return tb, b_pad


def _vmem_plan(tb, in_pad, out_pads, num_linear, gen):
    """Footprint of the fully-resident-weights design + a vmem_limit with headroom."""
    w_bytes = 0
    cur = in_pad
    for o_pad in out_pads:
        w_bytes += cur * o_pad * 2              # bf16, single-buffered (Buffered(1))
        cur = o_pad
    max_out_pad = max(out_pads)
    b_bytes = _round_up(num_linear, _SUBLANE) * max_out_pad * 4
    x_bytes = tb * in_pad * 2 * 2               # bf16 input tile, double-buffered
    o_bytes = tb * out_pads[-1] * 4 * 2         # f32 output tile, double-buffered
    act_bytes = tb * max(in_pad, max_out_pad) * (4 + 2) * 2   # f32 y + bf16 h (slack)
    need = w_bytes + b_bytes + x_bytes + o_bytes + act_bytes
    phys = (64 if gen == "v7x" else 128) << 20
    limit = min(int(phys * 0.9), max(int(need * 1.5), 32 << 20))
    return need, phys, limit


# ----------------------------------------------------------------------------
# Per-call forward (hot path): only x-padding + one pallas_call
# ----------------------------------------------------------------------------
@functools.partial(jax.jit, static_argnames=("meta",))
def mlp_classifier_forward_packed(x, packed, *, meta):
    batch, in_dim = x.shape
    assert in_dim == meta.in_dim, "input feature dim mismatch with packed params"
    num_linear = len(meta.out_pads)
    out_pad = meta.out_pads[-1]

    tb, b_pad = _choose_batch_tiling(batch, meta.gen)
    need, phys, vmem_limit = _vmem_plan(tb, meta.in_pad, meta.out_pads,
                                        num_linear, meta.gen)
    if need > int(phys * 0.9):
        # TODO(synk): stream weights from HBM (memory_space=pl.ANY +
        # pltpu.emit_pipeline over (tk, tn) weight tiles) when the all-resident
        # design exceeds VMEM (esp. v7x: 64 MiB/TC).
        raise NotImplementedError(
            f"MLP weights ({need >> 20} MiB) exceed resident-VMEM budget "
            f"({phys >> 20} MiB on {meta.gen}); weight streaming not implemented.")

    # Padded input built directly in bf16 (zero padding keeps padded cols inert).
    x_p = jnp.pad(x.astype(jnp.bfloat16),
                  ((0, b_pad - batch), (0, meta.in_pad - in_dim)))

    # Grid-varying input tile + grid-invariant (single-buffered) weights/biases.
    in_specs = [pl.BlockSpec((tb, meta.in_pad), lambda i: (i, 0))]
    cur = meta.in_pad
    for o_pad in meta.out_pads:
        in_specs.append(pl.BlockSpec((cur, o_pad), lambda i: (0, 0),
                                     pipeline_mode=pl.Buffered(1)))
        cur = o_pad
    in_specs.append(pl.BlockSpec(packed["b"].shape, lambda i: (0, 0),
                                 pipeline_mode=pl.Buffered(1)))

    kernel = functools.partial(_fused_mlp_kernel,
                               out_pads=meta.out_pads,
                               relu_bf16=meta.relu_bf16)

    out_p = pl.pallas_call(
        kernel,
        out_shape=jax.ShapeDtypeStruct((b_pad, out_pad), jnp.float32),
        grid=(b_pad // tb,),
        in_specs=in_specs,
        out_specs=pl.BlockSpec((tb, out_pad), lambda i: (i, 0)),
        compiler_params=pltpu.CompilerParams(
            dimension_semantics=("parallel",),   # batch tiles -> 2 TCs on v7x
            vmem_limit_bytes=vmem_limit,
        ),
    )(x_p, *packed["w"], packed["b"])

    # Strip lane/sublane padding (padded out lanes hold sigmoid(0)=0.5).
    return out_p[:batch, :meta.out_dim]


def mlp_classifier_forward(x, params):
    """Convenience wrapper (packs per call). For repeated inference, call
    pack_mlp_params once and use mlp_classifier_forward_packed directly."""
    packed, meta = pack_mlp_params(params)
    return mlp_classifier_forward_packed(x, packed, meta=meta)


# ----------------------------------------------------------------------------
# Init mirroring nn.Linear's U(-1/sqrt(fan_in), 1/sqrt(fan_in))
# ----------------------------------------------------------------------------
def init_params(key, input_dim, hidden_dim, output_dim, num_layers=1):
    def linear_init(k, fan_in, fan_out):
        kw, kb = jax.random.split(k)
        bound = 1.0 / jnp.sqrt(fan_in)
        w = jax.random.uniform(kw, (fan_out, fan_in), jnp.float32, -bound, bound)
        b = jax.random.uniform(kb, (1, fan_out), jnp.float32, -bound, bound)
        return w, b

    keys = jax.random.split(key, num_layers + 2)
    return {
        "inp": linear_init(keys[0], input_dim, hidden_dim),
        "hidden": [linear_init(keys[1 + i], hidden_dim, hidden_dim)
                   for i in range(num_layers)],
        "output": linear_init(keys[num_layers + 1], hidden_dim, output_dim),
    }


if __name__ == "__main__":
    # Small shapes consistent with the module: flat feature vectors.
    batch, input_dim, hidden_dim, output_dim, num_layers = 8, 16, 32, 4, 1

    key = jax.random.PRNGKey(0)
    k_x, k_p = jax.random.split(key)
    x = jax.random.normal(k_x, (batch, input_dim), jnp.float32)
    params = init_params(k_p, input_dim, hidden_dim, output_dim, num_layers)

    # One-time packing (outside the hot path), then jit'd fused forward.
    packed, meta = pack_mlp_params(params)
    out = jax.block_until_ready(
        mlp_classifier_forward_packed(x, packed, meta=meta))

    # Pure-f32 reference of the same math (kernel uses bf16 MXU operands with
    # f32 accumulation, so tolerance is relaxed accordingly).
    ref = jnp.maximum(x @ params["inp"][0].T + params["inp"][1], 0.0)
    for (w_h, b_h) in params["hidden"]:
        ref = jnp.maximum(ref @ w_h.T + b_h, 0.0)
    ref = jax.nn.sigmoid(ref @ params["output"][0].T + params["output"][1])

    assert out.shape == (batch, output_dim)
    assert jnp.allclose(out, ref, atol=2e-2), "mismatch vs reference"

    print("KERNEL_OK")
</pallas_src>

<mosaic_0001>
module attributes {stable_mosaic.version = 11 : i64} {
  func.func @_fused_mlp_kernel(%arg0: i32, %arg1: memref<8x128xbf16, #tpu.memory_space<vmem>>, %arg2: memref<128x128xbf16, #tpu.memory_space<vmem>>, %arg3: memref<128x128xbf16, #tpu.memory_space<vmem>>, %arg4: memref<128x128xbf16, #tpu.memory_space<vmem>>, %arg5: memref<3x128xf32, #tpu.memory_space<vmem>>, %arg6: memref<8x128xf32, #tpu.memory_space<vmem>>) attributes {dimension_semantics = [#tpu.dimension_semantics<parallel>], iteration_bounds = array<i64: 1>, scalar_prefetch = 0 : i64, scratch_operands = 0 : i64, tpu.core_type = #tpu.core_type<tc>, window_params = [{transform_indices = @transform_0, window_bounds = array<i64: 8, 128>}, {pipeline_mode = #tpu.pipeline_mode<synchronous>, transform_indices = @transform_1, window_bounds = array<i64: 128, 128>}, {pipeline_mode = #tpu.pipeline_mode<synchronous>, transform_indices = @transform_2, window_bounds = array<i64: 128, 128>}, {pipeline_mode = #tpu.pipeline_mode<synchronous>, transform_indices = @transform_3, window_bounds = array<i64: 128, 128>}, {pipeline_mode = #tpu.pipeline_mode<synchronous>, transform_indices = @transform_4, window_bounds = array<i64: 3, 128>}, {transform_indices = @transform_5, window_bounds = array<i64: 8, 128>}]} {
    %c0 = arith.constant 0 : index
    %c0_0 = arith.constant 0 : index
    %0 = vector.load %arg1[%c0, %c0_0] : memref<8x128xbf16, #tpu.memory_space<vmem>>, vector<8x128xbf16>
    %c0_1 = arith.constant 0 : index
    %c0_2 = arith.constant 0 : index
    %1 = vector.load %arg2[%c0_1, %c0_2] : memref<128x128xbf16, #tpu.memory_space<vmem>>, vector<128x128xbf16>
    %c0_3 = arith.constant 0 : index
    %c0_4 = arith.constant 0 : index
    %2 = vector.load %arg5[%c0_3, %c0_4] : memref<3x128xf32, #tpu.memory_space<vmem>>, vector<1x128xf32>
    %cst = arith.constant dense<0.000000e+00> : vector<8x128xf32>
    %3 = tpu.matmul %0, %1, %cst {dimension_numbers = #tpu.dot_dimension_numbers<[1], [0], [0], [1], [0, 0, 1, 1], [], []>} : vector<8x128xbf16>, vector<128x128xbf16>, vector<8x128xf32> -> vector<8x128xf32>
    %4 = vector.broadcast %2 : vector<1x128xf32> to vector<8x128xf32>
    %5 = arith.addf %3, %4 : vector<8x128xf32>
    %6 = arith.truncf %5 : vector<8x128xf32> to vector<8x128xbf16>
    %cst_5 = arith.constant 0.000000e+00 : bf16
    %7 = vector.broadcast %cst_5 : bf16 to vector<8x128xbf16>
    %8 = arith.maximumf %6, %7 : vector<8x128xbf16>
    %c0_6 = arith.constant 0 : index
    %c0_7 = arith.constant 0 : index
    %9 = vector.load %arg3[%c0_6, %c0_7] : memref<128x128xbf16, #tpu.memory_space<vmem>>, vector<128x128xbf16>
    %c1 = arith.constant 1 : index
    %c0_8 = arith.constant 0 : index
    %10 = vector.load %arg5[%c1, %c0_8] : memref<3x128xf32, #tpu.memory_space<vmem>>, vector<1x128xf32>
    %cst_9 = arith.constant dense<0.000000e+00> : vector<8x128xf32>
    %11 = tpu.matmul %8, %9, %cst_9 {dimension_numbers = #tpu.dot_dimension_numbers<[1], [0], [0], [1], [0, 0, 1, 1], [], []>} : vector<8x128xbf16>, vector<128x128xbf16>, vector<8x128xf32> -> vector<8x128xf32>
    %12 = vector.broadcast %10 : vector<1x128xf32> to vector<8x128xf32>
    %13 = arith.addf %11, %12 : vector<8x128xf32>
    %14 = arith.truncf %13 : vector<8x128xf32> to vector<8x128xbf16>
    %cst_10 = arith.constant 0.000000e+00 : bf16
    %15 = vector.broadcast %cst_10 : bf16 to vector<8x128xbf16>
    %16 = arith.maximumf %14, %15 : vector<8x128xbf16>
    %c0_11 = arith.constant 0 : index
    %c0_12 = arith.constant 0 : index
    %17 = vector.load %arg4[%c0_11, %c0_12] : memref<128x128xbf16, #tpu.memory_space<vmem>>, vector<128x128xbf16>
    %c2 = arith.constant 2 : index
    %c0_13 = arith.constant 0 : index
    %18 = vector.load %arg5[%c2, %c0_13] : memref<3x128xf32, #tpu.memory_space<vmem>>, vector<1x128xf32>
    %cst_14 = arith.constant dense<0.000000e+00> : vector<8x128xf32>
    %19 = tpu.matmul %16, %17, %cst_14 {dimension_numbers = #tpu.dot_dimension_numbers<[1], [0], [0], [1], [0, 0, 1, 1], [], []>} : vector<8x128xbf16>, vector<128x128xbf16>, vector<8x128xf32> -> vector<8x128xf32>
    %20 = vector.broadcast %18 : vector<1x128xf32> to vector<8x128xf32>
    %21 = arith.addf %19, %20 : vector<8x128xf32>
    %22 = arith.negf %21 : vector<8x128xf32>
    %23 = math.exp %22 : vector<8x128xf32>
    %cst_15 = arith.constant 1.000000e+00 : f32
    %24 = vector.broadcast %cst_15 : f32 to vector<8x128xf32>
    %25 = arith.addf %24, %23 : vector<8x128xf32>
    %26 = arith.divf %24, %25 : vector<8x128xf32>
    %c0_16 = arith.constant 0 : index
    %c0_17 = arith.constant 0 : index
    %27 = vector.load %arg6[%c0_16, %c0_17] : memref<8x128xf32, #tpu.memory_space<vmem>>, vector<8x128xf32>
    tpu.vector_store %arg6[%c0_16, %c0_17], %26 {strides = array<i32>} : memref<8x128xf32, #tpu.memory_space<vmem>>, vector<8x128xf32>,
    return
  }
  func.func @transform_0(%arg0: i32) -> (i32, i32) {
    %c0_i32 = arith.constant 0 : i32
    %c0_i32_0 = arith.constant 0 : i32
    return %arg0, %c0_i32 : i32, i32
  }
  func.func @transform_1(%arg0: i32) -> (i32, i32) {
    %c0_i32 = arith.constant 0 : i32
    %c0_i32_0 = arith.constant 0 : i32
    %c0_i32_1 = arith.constant 0 : i32
    return %c0_i32, %c0_i32_0 : i32, i32
  }
  func.func @transform_2(%arg0: i32) -> (i32, i32) {
    %c0_i32 = arith.constant 0 : i32
    %c0_i32_0 = arith.constant 0 : i32
    %c0_i32_1 = arith.constant 0 : i32
    return %c0_i32, %c0_i32_0 : i32, i32
  }
  func.func @transform_3(%arg0: i32) -> (i32, i32) {
    %c0_i32 = arith.constant 0 : i32
    %c0_i32_0 = arith.constant 0 : i32
    %c0_i32_1 = arith.constant 0 : i32
    return %c0_i32, %c0_i32_0 : i32, i32
  }
  func.func @transform_4(%arg0: i32) -> (i32, i32) {
    %c0_i32 = arith.constant 0 : i32
    %c0_i32_0 = arith.constant 0 : i32
    %c0_i32_1 = arith.constant 0 : i32
    return %c0_i32, %c0_i32_0 : i32, i32
  }
  func.func @transform_5(%arg0: i32) -> (i32, i32) {
    %c0_i32 = arith.constant 0 : i32
    %c0_i32_0 = arith.constant 0 : i32
    return %arg0, %c0_i32 : i32, i32
  }
}

</mosaic_0001>

<llo_original>
// kernel: mlp_classifier_forward_packed.1
$region0: #{mlp_classifier_forward_packed.1}
  #allocation0 [shape = 'u32[]', space=smem, size = 0x4, offset = 0x4, fixed_abs, tag = 'smem constant byte address 0x4 - core index']
  #allocation1 [shape = 'u32[144,128]{1,0:T(1,128)}', space=vmem, size = 0x12000, scoped, tag = 'internal scratch']
  %s0 = inlined_call_operand.vmem [shape: bf16[8,128], index: 0, kind: input, shape index: {}]
  %s1 = inlined_call_operand.hbm [shape: bf16[128,128], index: 1, kind: input, shape index: {}]
  %s2 = inlined_call_operand.hbm [shape: bf16[128,128], index: 2, kind: input, shape index: {}]
  %s3 = inlined_call_operand.hbm [shape: bf16[128,128], index: 3, kind: input, shape index: {}]
  %s4 = inlined_call_operand.vmem [shape: f32[3,128], index: 4, kind: input, shape index: {}]
  %s5 = inlined_call_operand.vmem [shape: f32[8,128], index: 5, kind: output, shape index: {}]
  %s6 = sld [smem:[#allocation0]]
  $region42: #{mlp_classifier_forward_packed.1} parent=0
    _
  %s8 = ssub.s32 1, %s6
  %s9 = scalar_select 0, %s8, %s6
  $region1: #{mlp_classifier_forward_packed.1} parent=0
    #allocation2 [shape = 'u8[32768]{0}', space=vmem, size = 0x8000, scoped, tag = 'input window, operand 1, single buffered']
    #allocation3 [shape = 's32[1]{0}', space=sflag, size = 0x4, scoped, tag = 'scoped memory for mlp_classifier_forward_packed.1']
    #allocation4 [shape = 'u8[32768]{0}', space=vmem, size = 0x8000, scoped, tag = 'input window, operand 2, single buffered']
    #allocation5 [shape = 's32[1]{0}', space=sflag, size = 0x4, scoped, tag = 'scoped memory for mlp_classifier_forward_packed.1']
    #allocation6 [shape = 'u8[32768]{0}', space=vmem, size = 0x8000, scoped, tag = 'input window, operand 3, single buffered']
    %10 = vsyncpa [#allocation3], 0
    %11 = vsyncpa [#allocation5], 0
    // Predicated region
    $region2: #{mlp_classifier_forward_packed.1} parent=1 // pred_check
      _
    $region3: #{mlp_classifier_forward_packed.1} parent=1 // pred_check_branch
      %13 = sbr.rel (0) target = $region5
    $region4: #{mlp_classifier_forward_packed.1} parent=1 // pred_region
      _
    $region5: #{mlp_classifier_forward_packed.1} parent=1 // pred_fallthru
      _
    // Predicated region
    $region6: #{mlp_classifier_forward_packed.1} parent=1 // pred_check
      _
    $region7: #{mlp_classifier_forward_packed.1} parent=1 // pred_check_branch
      %15 = sbr.rel (0) target = $region9
    $region8: #{mlp_classifier_forward_packed.1} parent=1 // pred_region
      %s17 = ssub.s32 1024, 1024
      %18 = vsyncadd [#allocation3], %s17
      %s19 = sshll.u32 [#allocation2], 4
      %s20 = int_to_ptr.vmem [resolvable:$true] %s19
      %25 = dma.hbm_to_vmem [thread:$0]  %s1, 1024, %s20, [#allocation3], 64, 64, 4
    $region9: #{mlp_classifier_forward_packed.1} parent=1 // pred_fallthru
      _
    // Predicated region
    $region10: #{mlp_classifier_forward_packed.1} parent=1 // pred_check
      _
    $region11: #{mlp_classifier_forward_packed.1} parent=1 // pred_check_branch
      %27 = sbr.rel (0) target = $region13
    $region12: #{mlp_classifier_forward_packed.1} parent=1 // pred_region
      %s29 = ssub.s32 1024, 1024
      %30 = vsyncadd [#allocation5], %s29
      %s31 = sshll.u32 [#allocation4], 4
      %s32 = int_to_ptr.vmem [resolvable:$true] %s31
      %37 = dma.hbm_to_vmem [thread:$0]  %s2, 1024, %s32, [#allocation5], 64, 64, 4
    $region13: #{mlp_classifier_forward_packed.1} parent=1 // pred_fallthru
      _
    // Predicated region
    $region14: #{mlp_classifier_forward_packed.1} parent=1 // pred_check
      _
    $region15: #{mlp_classifier_forward_packed.1} parent=1 // pred_check_branch
      %39 = sbr.rel (0) target = $region17
    $region16: #{mlp_classifier_forward_packed.1} parent=1 // pred_region
      %s41 = ssub.s32 1024, 1024
      %42 = vsyncadd [#allocation5], %s41
      %s43 = sshll.u32 [#allocation6], 4
      %s44 = int_to_ptr.vmem [resolvable:$true] %s43
      %49 = dma.hbm_to_vmem [thread:$0]  %s3, 1024, %s44, [#allocation5], 64, 64, 4
    $region17: #{mlp_classifier_forward_packed.1} parent=1 // pred_fallthru
      _
    // Predicated region
    $region18: #{mlp_classifier_forward_packed.1} parent=1 // pred_check
      _
    $region19: #{mlp_classifier_forward_packed.1} parent=1 // pred_check_branch
      %51 = sbr.rel (0) target = $region21
    $region20: #{mlp_classifier_forward_packed.1} parent=1 // pred_region
      _
    $region21: #{mlp_classifier_forward_packed.1} parent=1 // pred_fallthru
      _
    // Predicated region
    $region22: #{mlp_classifier_forward_packed.1} parent=1 // pred_check
      _
    $region23: #{mlp_classifier_forward_packed.1} parent=1 // pred_check_branch
      %53 = sbr.rel (0) target = $region25
    $region24: #{mlp_classifier_forward_packed.1} parent=1 // pred_region
      %54 = dma.done [#allocation3], 1024
    $region25: #{mlp_classifier_forward_packed.1} parent=1 // pred_fallthru
      _
    // Predicated region
    $region26: #{mlp_classifier_forward_packed.1} parent=1 // pred_check
      _
    $region27: #{mlp_classifier_forward_packed.1} parent=1 // pred_check_branch
      %56 = sbr.rel (0) target = $region29
    $region28: #{mlp_classifier_forward_packed.1} parent=1 // pred_region
      %57 = dma.done [#allocation5], 1024
    $region29: #{mlp_classifier_forward_packed.1} parent=1 // pred_fallthru
      _
    // Predicated region
    $region30: #{mlp_classifier_forward_packed.1} parent=1 // pred_check
      _
    $region31: #{mlp_classifier_forward_packed.1} parent=1 // pred_check_branch
      %59 = sbr.rel (0) target = $region33
    $region32: #{mlp_classifier_forward_packed.1} parent=1 // pred_region
      %60 = dma.done [#allocation5], 1024
    $region33: #{mlp_classifier_forward_packed.1} parent=1 // pred_fallthru
      _
    %v62 = vld [vmem:[%s0] sm:$0xf]
    %v63 = vld [vmem:[#allocation2] sm:$0xf]
    %v64 = vld [vmem:[#allocation2 + $0x4] sm:$0xf]
    %v65 = vld [vmem:[#allocation2 + $0x8] sm:$0xf]
    %v66 = vld [vmem:[#allocation2 + $0xc] sm:$0xf]
    %v67 = vld [vmem:[#allocation2 + $0x10] sm:$0xf]
    %v68 = vld [vmem:[#allocation2 + $0x14] sm:$0xf]
    %v69 = vld [vmem:[#allocation2 + $0x18] sm:$0xf]
    %v70 = vld [vmem:[#allocation2 + $0x1c] sm:$0xf]
    %v71 = vld [vmem:[#allocation2 + $0x20] sm:$0xf]
    %v72 = vld [vmem:[#allocation2 + $0x24] sm:$0xf]
    %v73 = vld [vmem:[#allocation2 + $0x28] sm:$0xf]
    %v74 = vld [vmem:[#allocation2 + $0x2c] sm:$0xf]
    %v75 = vld [vmem:[#allocation2 + $0x30] sm:$0xf]
    %v76 = vld [vmem:[#allocation2 + $0x34] sm:$0xf]
    %v77 = vld [vmem:[#allocation2 + $0x38] sm:$0xf]
    %v78 = vld [vmem:[#allocation2 + $0x3c] sm:$0xf]
    %v79 = vld [vmem:[%s4] sm:$0x1]
    %v80 = vlaneseq
    %v81 = vshrl.u32 %v80, 7
    %v82 = vsub.s32 0, %v81
    %v83 = vrot.slane %v79, %v82
    %v100 = vunpack.c.l.b16 %v63
    %v101 = vunpack.c.l.b16 %v64
    %v102 = vunpack.c.l.b16 %v65
    %v103 = vunpack.c.l.b16 %v66
    %v104 = vunpack.c.l.b16 %v67
    %v105 = vunpack.c.l.b16 %v68
    %v106 = vunpack.c.l.b16 %v69
    %v107 = vunpack.c.l.b16 %v70
    %v108 = vunpack.c.l.b16 %v71
    %v109 = vunpack.c.l.b16 %v72
    %v110 = vunpack.c.l.b16 %v73
    %v111 = vunpack.c.l.b16 %v74
    %v112 = vunpack.c.l.b16 %v75
    %v113 = vunpack.c.l.b16 %v76
    %v114 = vunpack.c.l.b16 %v77
    %v115 = vunpack.c.l.b16 %v78
    %v116 = vpack.c.b16 %v101, %v100
    %v117 = vpack.c.b16 %v103, %v102
    %v118 = vpack.c.b16 %v105, %v104
    %v119 = vpack.c.b16 %v107, %v106
    %v120 = vpack.c.b16 %v109, %v108
    %v121 = vpack.c.b16 %v111, %v110
    %v122 = vpack.c.b16 %v113, %v112
    %v123 = vpack.c.b16 %v115, %v114
    %132 = vmatprep.subr.bf16.mxu0 0
    %133 = vmatpush1.bf16.msra.mxu0 %v123
    %134 = vmatprep.subr.bf16.mxu0 0
    %135 = vmatpush1.bf16.msra.mxu0 %v122
    %136 = vmatprep.subr.bf16.mxu0 0
    %137 = vmatpush1.bf16.msra.mxu0 %v121
    %138 = vmatprep.subr.bf16.mxu0 0
    %139 = vmatpush1.bf16.msra.mxu0 %v120
    %140 = vmatprep.subr.bf16.mxu0 0
    %141 = vmatpush1.bf16.msra.mxu0 %v119
    %142 = vmatprep.subr.bf16.mxu0 0
    %143 = vmatpush1.bf16.msra.mxu0 %v118
    %144 = vmatprep.subr.bf16.mxu0 0
    %145 = vmatpush1.bf16.msra.mxu0 %v117
    %146 = vmatprep.subr.bf16.mxu0 0
    %147 = vmatpush1.bf16.msra.mxu0 %v116
    %148 = vmatprep.subr.bf16.mxu0 0
    %149 = vmatpush2.bf16.msra.mxu0 0
    %150 = vmatprep.subr.bf16.mxu0 0
    %151 = vmatpush2.bf16.msra.mxu0 0
    %152 = vmatprep.subr.bf16.mxu0 0
    %153 = vmatpush2.bf16.msra.mxu0 0
    %154 = vmatprep.subr.bf16.mxu0 0
    %155 = vmatpush2.bf16.msra.mxu0 0
    %156 = vmatprep.subr.bf16.mxu0 0
    %157 = vmatpush2.bf16.msra.mxu0 0
    %158 = vmatprep.subr.bf16.mxu0 0
    %159 = vmatpush2.bf16.msra.mxu0 0
    %160 = vmatprep.subr.bf16.mxu0 0
    %161 = vmatpush2.bf16.msra.mxu0 0
    %162 = vmatprep.subr.bf16.mxu0 0
    %163 = vmatpush2.bf16.msra.mxu0 0
    %164 = vmatprep.mubr.bf16.mxu0 0
    %165 = vmatmul.mubr.bf16.gmra.mxu0 %v62
    %v166 = vpop.f32.mrf.mxu0
    %v167 = vadd.f32 %v83, %v166
    %v168 = vpop.f32.mrf.mxu0
    %v169 = vpop.f32.mrf.mxu0
    %v170 = vpop.f32.mrf.mxu0
    %171 = vdwg.mxu0
    %v172 = vpack.c.bf16 %v167, %v167
    %v173 = vmax.bf16 %v172, 0
    %v174 = vld [vmem:[#allocation4] sm:$0xf]
    %v175 = vld [vmem:[#allocation4 + $0x4] sm:$0xf]
    %v176 = vld [vmem:[#allocation4 + $0x8] sm:$0xf]
    %v177 = vld [vmem:[#allocation4 + $0xc] sm:$0xf]
    %v178 = vld [vmem:[#allocation4 + $0x10] sm:$0xf]
    %v179 = vld [vmem:[#allocation4 + $0x14] sm:$0xf]
    %v180 = vld [vmem:[#allocation4 + $0x18] sm:$0xf]
    %v181 = vld [vmem:[#allocation4 + $0x1c] sm:$0xf]
    %v182 = vld [vmem:[#allocation4 + $0x20] sm:$0xf]
    %v183 = vld [vmem:[#allocation4 + $0x24] sm:$0xf]
    %v184 = vld [vmem:[#allocation4 + $0x28] sm:$0xf]
    %v185 = vld [vmem:[#allocation4 + $0x2c] sm:$0xf]
    %v186 = vld [vmem:[#allocation4 + $0x30] sm:$0xf]
    %v187 = vld [vmem:[#allocation4 + $0x34] sm:$0xf]
    %v188 = vld [vmem:[#allocation4 + $0x38] sm:$0xf]
    %v189 = vld [vmem:[#allocation4 + $0x3c] sm:$0xf]
    %v190 = vld [vmem:[%s4 + $0x1] sm:$0x1]
    %v191 = vlaneseq
    %v192 = vshrl.u32 %v191, 7
    %v193 = vsub.s32 0, %v192
    %v194 = vrot.slane %v190, %v193
    %v211 = vunpack.c.l.b16 %v174
    %v212 = vunpack.c.l.b16 %v175
    %v213 = vunpack.c.l.b16 %v176
    %v214 = vunpack.c.l.b16 %v177
    %v215 = vunpack.c.l.b16 %v178
    %v216 = vunpack.c.l.b16 %v179
    %v217 = vunpack.c.l.b16 %v180
    %v218 = vunpack.c.l.b16 %v181
    %v219 = vunpack.c.l.b16 %v182
    %v220 = vunpack.c.l.b16 %v183
    %v221 = vunpack.c.l.b16 %v184
    %v222 = vunpack.c.l.b16 %v185
    %v223 = vunpack.c.l.b16 %v186
    %v224 = vunpack.c.l.b16 %v187
    %v225 = vunpack.c.l.b16 %v188
    %v226 = vunpack.c.l.b16 %v189
    %v227 = vpack.c.b16 %v212, %v211
    %v228 = vpack.c.b16 %v214, %v213
    %v229 = vpack.c.b16 %v216, %v215
    %v230 = vpack.c.b16 %v218, %v217
    %v231 = vpack.c.b16 %v220, %v219
    %v232 = vpack.c.b16 %v222, %v221
    %v233 = vpack.c.b16 %v224, %v223
    %v234 = vpack.c.b16 %v226, %v225
    %243 = vmatprep.subr.bf16.mxu0 0
    %244 = vmatpush1.bf16.msra.mxu0 %v234
    %245 = vmatprep.subr.bf16.mxu0 0
    %246 = vmatpush1.bf16.msra.mxu0 %v233
    %247 = vmatprep.subr.bf16.mxu0 0
    %248 = vmatpush1.bf16.msra.mxu0 %v232
    %249 = vmatprep.subr.bf16.mxu0 0
    %250 = vmatpush1.bf16.msra.mxu0 %v231
    %251 = vmatprep.subr.bf16.mxu0 0
    %252 = vmatpush1.bf16.msra.mxu0 %v230
    %253 = vmatprep.subr.bf16.mxu0 0
    %254 = vmatpush1.bf16.msra.mxu0 %v229
    %255 = vmatprep.subr.bf16.mxu0 0
    %256 = vmatpush1.bf16.msra.mxu0 %v228
    %257 = vmatprep.subr.bf16.mxu0 0
    %258 = vmatpush1.bf16.msra.mxu0 %v227
    %259 = vmatprep.subr.bf16.mxu0 0
    %260 = vmatpush2.bf16.msra.mxu0 0
    %261 = vmatprep.subr.bf16.mxu0 0
    %262 = vmatpush2.bf16.msra.mxu0 0
    %263 = vmatprep.subr.bf16.mxu0 0
    %264 = vmatpush2.bf16.msra.mxu0 0
    %265 = vmatprep.subr.bf16.mxu0 0
    %266 = vmatpush2.bf16.msra.mxu0 0
    %267 = vmatprep.subr.bf16.mxu0 0
    %268 = vmatpush2.bf16.msra.mxu0 0
    %269 = vmatprep.subr.bf16.mxu0 0
    %270 = vmatpush2.bf16.msra.mxu0 0
    %271 = vmatprep.subr.bf16.mxu0 0
    %272 = vmatpush2.bf16.msra.mxu0 0
    %273 = vmatprep.subr.bf16.mxu0 0
    %274 = vmatpush2.bf16.msra.mxu0 0
    %275 = vmatprep.mubr.bf16.mxu0 0
    %276 = vmatmul.mubr.bf16.gmra.mxu0 %v173
    %v277 = vpop.f32.mrf.mxu0
    %v278 = vadd.f32 %v194, %v277
    %v279 = vpop.f32.mrf.mxu0
    %v280 = vpop.f32.mrf.mxu0
    %v281 = vpop.f32.mrf.mxu0
    %282 = vdwg.mxu0
    %v283 = vpack.c.bf16 %v278, %v278
    %v284 = vmax.bf16 %v283, 0
    %v285 = vld [vmem:[#allocation6] sm:$0xf]
    %v286 = vld [vmem:[#allocation6 + $0x4] sm:$0xf]
    %v287 = vld [vmem:[#allocation6 + $0x8] sm:$0xf]
    %v288 = vld [vmem:[#allocation6 + $0xc] sm:$0xf]
    %v289 = vld [vmem:[#allocation6 + $0x10] sm:$0xf]
    %v290 = vld [vmem:[#allocation6 + $0x14] sm:$0xf]
    %v291 = vld [vmem:[#allocation6 + $0x18] sm:$0xf]
    %v292 = vld [vmem:[#allocation6 + $0x1c] sm:$0xf]
    %v293 = vld [vmem:[#allocation6 + $0x20] sm:$0xf]
    %v294 = vld [vmem:[#allocation6 + $0x24] sm:$0xf]
    %v295 = vld [vmem:[#allocation6 + $0x28] sm:$0xf]
    %v296 = vld [vmem:[#allocation6 + $0x2c] sm:$0xf]
    %v297 = vld [vmem:[#allocation6 + $0x30] sm:$0xf]
    %v298 = vld [vmem:[#allocation6 + $0x34] sm:$0xf]
    %v299 = vld [vmem:[#allocation6 + $0x38] sm:$0xf]
    %v300 = vld [vmem:[#allocation6 + $0x3c] sm:$0xf]
    %v301 = vld [vmem:[%s4 + $0x2] sm:$0x1]
    %v302 = vlaneseq
    %v303 = vshrl.u32 %v302, 7
    %v304 = vsub.s32 0, %v303
    %v305 = vrot.slane %v301, %v304
    %v322 = vunpack.c.l.b16 %v285
    %v323 = vunpack.c.l.b16 %v286
    %v324 = vunpack.c.l.b16 %v287
    %v325 = vunpack.c.l.b16 %v288
    %v326 = vunpack.c.l.b16 %v289
    %v327 = vunpack.c.l.b16 %v290
    %v328 = vunpack.c.l.b16 %v291
    %v329 = vunpack.c.l.b16 %v292
    %v330 = vunpack.c.l.b16 %v293
    %v331 = vunpack.c.l.b16 %v294
    %v332 = vunpack.c.l.b16 %v295
    %v333 = vunpack.c.l.b16 %v296
    %v334 = vunpack.c.l.b16 %v297
    %v335 = vunpack.c.l.b16 %v298
    %v336 = vunpack.c.l.b16 %v299
    %v337 = vunpack.c.l.b16 %v300
    %v338 = vpack.c.b16 %v323, %v322
    %v339 = vpack.c.b16 %v325, %v324
    %v340 = vpack.c.b16 %v327, %v326
    %v341 = vpack.c.b16 %v329, %v328
    %v342 = vpack.c.b16 %v331, %v330
    %v343 = vpack.c.b16 %v333, %v332
    %v344 = vpack.c.b16 %v335, %v334
    %v345 = vpack.c.b16 %v337, %v336
    %354 = vmatprep.subr.bf16.mxu0 0
    %355 = vmatpush1.bf16.msra.mxu0 %v345
    %356 = vmatprep.subr.bf16.mxu0 0
    %357 = vmatpush1.bf16.msra.mxu0 %v344
    %358 = vmatprep.subr.bf16.mxu0 0
    %359 = vmatpush1.bf16.msra.mxu0 %v343
    %360 = vmatprep.subr.bf16.mxu0 0
    %361 = vmatpush1.bf16.msra.mxu0 %v342
    %362 = vmatprep.subr.bf16.mxu0 0
    %363 = vmatpush1.bf16.msra.mxu0 %v341
    %364 = vmatprep.subr.bf16.mxu0 0
    %365 = vmatpush1.bf16.msra.mxu0 %v340
    %366 = vmatprep.subr.bf16.mxu0 0
    %367 = vmatpush1.bf16.msra.mxu0 %v339
    %368 = vmatprep.subr.bf16.mxu0 0
    %369 = vmatpush1.bf16.msra.mxu0 %v338
    %370 = vmatprep.subr.bf16.mxu0 0
    %371 = vmatpush2.bf16.msra.mxu0 0
    %372 = vmatprep.subr.bf16.mxu0 0
    %373 = vmatpush2.bf16.msra.mxu0 0
    %374 = vmatprep.subr.bf16.mxu0 0
    %375 = vmatpush2.bf16.msra.mxu0 0
    %376 = vmatprep.subr.bf16.mxu0 0
    %377 = vmatpush2.bf16.msra.mxu0 0
    %378 = vmatprep.subr.bf16.mxu0 0
    %379 = vmatpush2.bf16.msra.mxu0 0
    %380 = vmatprep.subr.bf16.mxu0 0
    %381 = vmatpush2.bf16.msra.mxu0 0
    %382 = vmatprep.subr.bf16.mxu0 0
    %383 = vmatpush2.bf16.msra.mxu0 0
    %384 = vmatprep.subr.bf16.mxu0 0
    %385 = vmatpush2.bf16.msra.mxu0 0
    %386 = vmatprep.mubr.bf16.mxu0 0
    %387 = vmatmul.mubr.bf16.gmra.mxu0 %v284
    %v388 = vpop.f32.mrf.mxu0
    %v389 = vadd.f32 %v305, %v388
    %v390 = vpop.f32.mrf.mxu0
    %v391 = vpop.f32.mrf.mxu0
    %v392 = vpop.f32.mrf.mxu0
    %393 = vdwg.mxu0
    %v394 = vxor.u32 %v389, 2147483648
    %v395 = vmul.f32 %v394, 1.442695
    %v396 = vpow.pop %v395
    %v397 = vadd.f32 %v396, 1.0
    %v398 = vrcp.pop %v397
    %v399 = vmul.f32 1.0, %v398
    %400 = vst [vmem:[%s5] sm:$0xff] %v399
    // Predicated region
    $region34: #{mlp_classifier_forward_packed.1} parent=1 // pred_check
      _
    $region35: #{mlp_classifier_forward_packed.1} parent=1 // pred_check_branch
      %402 = sbr.rel (0) target = $region37
    $region36: #{mlp_classifier_forward_packed.1} parent=1 // pred_region
      _
    $region37: #{mlp_classifier_forward_packed.1} parent=1 // pred_fallthru
      _
    // Predicated region
    $region38: #{mlp_classifier_forward_packed.1} parent=1 // pred_check
      _
    $region39: #{mlp_classifier_forward_packed.1} parent=1 // pred_check_branch
      %404 = sbr.rel (0) target = $region41
    $region40: #{mlp_classifier_forward_packed.1} parent=1 // pred_region
      _
    $region41: #{mlp_classifier_forward_packed.1} parent=1 // pred_fallthru
      _
    %405 = vsyncpa [#allocation3], 1
    %406 = vsyncpa [#allocation5], 1

</llo_original>
